<compile_context>
chip_gen: v7x
topology: tpu7x:2x2x1
jax: 0.10.0
libtpu: 0.0.40
codegen_flags: <defaults>
</compile_context>

<pallas_src>
import jax
import jax.numpy as jnp
from jax import lax
from jax.experimental import pallas as pl
from jax.experimental.pallas import tpu as pltpu


def _round_up(x, m=128):
    return ((x + m - 1) // m) * m


# -----------------------------------------------------------------------------
# Kernel 1: ConvTranspose2d(kernel=2, stride=2) as a per-pixel matmul.
# Input is pre-flattened to (N, h*w, Cin); output channels hold the 2x2 sub-pixel
# taps flattened as (dy, dx, cout), padded to a multiple of 128 so stores are
# lane-dense.  The depth-to-space interleave is a free row-major reshape /
# transpose in the JAX wrapper.
# -----------------------------------------------------------------------------
def _upconv2x2_kernel(x_ref, w_ref, b_ref, o_ref):
    xv = x_ref[0].astype(jnp.bfloat16)                       # (h*w, Cin)
    y = jnp.dot(xv, w_ref[...], preferred_element_type=jnp.float32)
    o_ref[0] = y + b_ref[...]                                # (h*w, Kpad)


def upconv2x2(x_nhwc, wt_flat, bt_flat, cout):
    n, h, w, ci = x_nhwc.shape
    k_pad = wt_flat.shape[1]
    xf = x_nhwc.reshape(n, h * w, ci)
    y = pl.pallas_call(
        _upconv2x2_kernel,
        out_shape=jax.ShapeDtypeStruct((n, h * w, k_pad), jnp.float32),
        grid=(n,),
        in_specs=[
            pl.BlockSpec((1, h * w, ci), lambda b: (b, 0, 0)),
            pl.BlockSpec((ci, k_pad), lambda b: (0, 0)),
            pl.BlockSpec((1, k_pad), lambda b: (0, 0)),
        ],
        out_specs=pl.BlockSpec((1, h * w, k_pad), lambda b: (b, 0, 0)),
        compiler_params=pltpu.CompilerParams(dimension_semantics=("parallel",)),
    )(xf, wt_flat, bt_flat)
    # depth-to-space: channel index (dy, dx, cout) -> out[2i+dy, 2j+dx, cout]
    y = y[:, :, : 4 * cout].reshape(n, h, w, 2, 2, cout)
    y = jnp.transpose(y, (0, 1, 3, 2, 4, 5)).reshape(n, 2 * h, 2 * w, cout)
    return y


# -----------------------------------------------------------------------------
# Kernel 2: fused DoubleConv on concat([skip, up], C):
#   conv3x3(pad=1) + bias + ReLU  ->  conv3x3(pad=1) + bias + ReLU
# Grid (N, H // TILE_H).  The two conv1 operands are copied once per image into
# zero-padded VMEM scratch (in-kernel padding + channel padding); each output row
# tile recomputes a (TILE_H+2)-row strip of the intermediate activation in a VMEM
# scratch and accumulates conv2 directly into the output block.
# -----------------------------------------------------------------------------
def _double_conv_kernel(skip_ref, up_ref, w1a_ref, w1b_ref, b1_ref, w2_ref,
                        b2_ref, o_ref, skip_pad, up_pad, mid):
    H, W = skip_ref.shape[1], skip_ref.shape[2]
    ca, cb = skip_ref.shape[3], up_ref.shape[3]
    ca_pad, cb_pad = skip_pad.shape[2], up_pad.shape[2]
    T = o_ref.shape[1]
    cmid_pad = mid.shape[2]
    cout_pad = o_ref.shape[3]
    rows_ext = T + 2
    cols_ext = mid.shape[1]            # W + 8 (halo width rounded to multiple of 8)

    h_idx = pl.program_id(1)
    row0 = h_idx * T

    # Per-image setup: build zero-padded, channel-padded copies of the two conv1
    # operands in VMEM (no jnp.pad / jnp.concatenate in HBM).
    @pl.when(h_idx == 0)
    def _():
        skip_pad[...] = jnp.zeros_like(skip_pad)
        up_pad[...] = jnp.zeros_like(up_pad)
        skip_pad[2:H + 2, 2:W + 2, :ca] = skip_ref[0]
        up_pad[2:H + 2, 2:W + 2, :cb] = up_ref[0]

    # ---- conv1 (+bias +ReLU) into the per-tile VMEM scratch `mid` -----------
    # conv1(concat(skip, up)) == conv1_a(skip) + conv1_b(up)
    mid[...] = jnp.zeros_like(mid)
    for dy in range(3):
        for dx in range(3):
            a = skip_pad[pl.ds(row0 + dy, rows_ext), dx:dx + cols_ext, :]
            mid[...] += jnp.dot(
                a.astype(jnp.bfloat16).reshape(rows_ext * cols_ext, ca_pad),
                w1a_ref[dy, dx],
                preferred_element_type=jnp.float32,
            ).reshape(rows_ext, cols_ext, cmid_pad)
            b = up_pad[pl.ds(row0 + dy, rows_ext), dx:dx + cols_ext, :]
            mid[...] += jnp.dot(
                b.astype(jnp.bfloat16).reshape(rows_ext * cols_ext, cb_pad),
                w1b_ref[dy, dx],
                preferred_element_type=jnp.float32,
            ).reshape(rows_ext, cols_ext, cmid_pad)

    # bias + ReLU; zero halo rows/cols that fall outside the image so conv2 sees
    # exactly the zero-padded conv1 activation.
    t_idx = lax.broadcasted_iota(jnp.int32, (rows_ext, cols_ext, cmid_pad), 0)
    u_idx = lax.broadcasted_iota(jnp.int32, (rows_ext, cols_ext, cmid_pad), 1)
    g_row = row0 - 1 + t_idx
    valid = (g_row >= 0) & (g_row < H) & (u_idx >= 1) & (u_idx <= W)
    mid[...] = jnp.where(valid, jnp.maximum(mid[...] + b1_ref[...], 0.0), 0.0)
    # TODO(synk): dropout1 is eval-mode identity; training-mode RNG dropout not implemented.

    # ---- conv2 (+bias +ReLU), accumulated straight into the output block ----
    o_ref[...] = jnp.zeros_like(o_ref)
    for ky in range(3):
        for kx in range(3):
            m = mid[ky:ky + T, kx:kx + W, :].astype(jnp.bfloat16)
            o_ref[...] += jnp.dot(
                m.reshape(T * W, cmid_pad), w2_ref[ky, kx],
                preferred_element_type=jnp.float32,
            ).reshape(1, T, W, cout_pad)
    o_ref[...] = jnp.maximum(o_ref[...] + b2_ref[...], 0.0)
    # TODO(synk): dropout2 is eval-mode identity; training-mode RNG dropout not implemented.


def double_conv_fused(skip_nhwc, up_nhwc, w1a, w1b, b1, w2, b2, cout, tile_h=8):
    N, H, W, ca = skip_nhwc.shape
    cb = up_nhwc.shape[3]
    assert up_nhwc.shape[:3] == (N, H, W)
    assert H % tile_h == 0 and W % 8 == 0, "spatial dims must be multiples of 8"
    ca_pad, cmid_pad = w1a.shape[2], w1a.shape[3]
    cb_pad = w1b.shape[2]
    cout_pad = w2.shape[3]
    T = tile_h
    cols_ext = W + 8                   # (W + 2) halo, rounded up to multiple of 8

    out = pl.pallas_call(
        _double_conv_kernel,
        out_shape=jax.ShapeDtypeStruct((N, H, W, cout_pad), jnp.float32),
        grid=(N, H // T),
        in_specs=[
            pl.BlockSpec((1, H, W, ca), lambda n, h: (n, 0, 0, 0)),
            pl.BlockSpec((1, H, W, cb), lambda n, h: (n, 0, 0, 0)),
            pl.BlockSpec((3, 3, ca_pad, cmid_pad), lambda n, h: (0, 0, 0, 0)),
            pl.BlockSpec((3, 3, cb_pad, cmid_pad), lambda n, h: (0, 0, 0, 0)),
            pl.BlockSpec((1, cmid_pad), lambda n, h: (0, 0)),
            pl.BlockSpec((3, 3, cmid_pad, cout_pad), lambda n, h: (0, 0, 0, 0)),
            pl.BlockSpec((1, cout_pad), lambda n, h: (0, 0)),
        ],
        out_specs=pl.BlockSpec((1, T, W, cout_pad), lambda n, h: (n, h, 0, 0)),
        scratch_shapes=[
            pltpu.VMEM((H + 4, cols_ext + 2, ca_pad), jnp.float32),
            pltpu.VMEM((H + 4, cols_ext + 2, cb_pad), jnp.float32),
            pltpu.VMEM((T + 2, cols_ext, cmid_pad), jnp.float32),
        ],
        compiler_params=pltpu.CompilerParams(
            dimension_semantics=("parallel", "arbitrary")),
    )(skip_nhwc, up_nhwc, w1a, w1b, b1, w2, b2)
    return out[..., :cout]


# -----------------------------------------------------------------------------
# Parameters (PyTorch layout) and conversion into kernel-friendly form.
# -----------------------------------------------------------------------------
def init_upsample_params(key, depth, channel_multiplier, initial_channel_size):
    chans = [(initial_channel_size * channel_multiplier ** (depth + 1),
              initial_channel_size * channel_multiplier ** depth)]
    for i in reversed(range(depth)):
        chans.append((initial_channel_size * channel_multiplier ** (i + 1),
                      initial_channel_size * channel_multiplier ** i))
    blocks = []
    for cin, cout in chans:
        key, k1, k2, k3, k4, k5, k6 = jax.random.split(key, 7)
        bt_b = (cin * 4) ** -0.5
        b1_b = (2 * cout * 9) ** -0.5
        b2_b = (cout * 9) ** -0.5
        blocks.append(dict(
            wt=jax.random.uniform(k1, (cin, cout, 2, 2), jnp.float32, -bt_b, bt_b),
            bt=jax.random.uniform(k2, (cout,), jnp.float32, -bt_b, bt_b),
            w1=jax.random.uniform(k3, (cout, 2 * cout, 3, 3), jnp.float32, -b1_b, b1_b),
            b1=jax.random.uniform(k4, (cout,), jnp.float32, -b1_b, b1_b),
            w2=jax.random.uniform(k5, (cout, cout, 3, 3), jnp.float32, -b2_b, b2_b),
            b2=jax.random.uniform(k6, (cout,), jnp.float32, -b2_b, b2_b),
        ))
    return blocks


def prepare_block_for_kernels(bp):
    """torch-layout params -> HWIO, bf16, channel-padded kernel params."""
    cin, cout = bp["wt"].shape[0], bp["wt"].shape[1]
    cpad = _round_up(cout)
    k_pad = _round_up(4 * cout)

    # ConvTranspose2d weight (Cin, Cout, 2, 2) -> (Cin, 4*Cout) with (dy, dx, co)
    wt_flat = jnp.transpose(bp["wt"], (0, 2, 3, 1)).reshape(cin, 4 * cout)
    wt_flat = jnp.pad(wt_flat, ((0, 0), (0, k_pad - 4 * cout))).astype(jnp.bfloat16)
    bt_flat = jnp.pad(jnp.tile(bp["bt"], 4), (0, k_pad - 4 * cout))
    bt_flat = bt_flat.reshape(1, k_pad).astype(jnp.float32)

    # Conv2d OIHW -> HWIO; split conv1 input channels: [:cout]=skip, [cout:]=up.
    w1_hwio = jnp.transpose(bp["w1"], (2, 3, 1, 0))
    pad_io = ((0, 0), (0, 0), (0, cpad - cout), (0, cpad - cout))
    w1a = jnp.pad(w1_hwio[:, :, :cout, :], pad_io).astype(jnp.bfloat16)
    w1b = jnp.pad(w1_hwio[:, :, cout:, :], pad_io).astype(jnp.bfloat16)
    b1 = jnp.pad(bp["b1"], (0, cpad - cout)).reshape(1, cpad).astype(jnp.float32)

    w2_hwio = jnp.transpose(bp["w2"], (2, 3, 1, 0))
    w2 = jnp.pad(w2_hwio, pad_io).astype(jnp.bfloat16)
    b2 = jnp.pad(bp["b2"], (0, cpad - cout)).reshape(1, cpad).astype(jnp.float32)

    return dict(cout=cout, wt=wt_flat, bt=bt_flat,
                w1a=w1a, w1b=w1b, b1=b1, w2=w2, b2=b2)


def upsample_forward(x_nchw, down_tensors_nchw, kernel_params):
    """UpSample forward (eval mode).  Inputs NCHW like the PyTorch module."""
    x = jnp.transpose(x_nchw, (0, 2, 3, 1))                      # NCHW -> NHWC
    for i, kp in enumerate(kernel_params):
        skip = jnp.transpose(down_tensors_nchw[-(i + 1)], (0, 2, 3, 1))
        up = upconv2x2(x, kp["wt"], kp["bt"], kp["cout"])
        # nn.Dropout right after up_conv: identity in eval mode.
        assert skip.shape == up.shape, (skip.shape, up.shape)
        # torch.cat([skip, up], C) + DoubleConv, with the concat folded into the
        # fused kernel via the split conv1 weights (w1a=skip part, w1b=up part).
        x = double_conv_fused(skip, up, kp["w1a"], kp["w1b"], kp["b1"],
                              kp["w2"], kp["b2"], kp["cout"])
    return jnp.transpose(x, (0, 3, 1, 2))                        # NHWC -> NCHW


# -----------------------------------------------------------------------------
# Pure-JAX reference for a sanity check (f32 throughout).
# -----------------------------------------------------------------------------
def _reference(x_nchw, down_tensors_nchw, torch_params):
    def conv3x3_relu(x, w_oihw, b):
        w = jnp.transpose(w_oihw, (2, 3, 1, 0))
        y = lax.conv_general_dilated(x, w, (1, 1), ((1, 1), (1, 1)),
                                     dimension_numbers=("NCHW", "HWIO", "NCHW"))
        return jnp.maximum(y + b.reshape(1, -1, 1, 1), 0.0)

    def upconv(x, wt, bt):                    # ConvTranspose2d(k=2, s=2)
        n, _, h, w = x.shape
        co = wt.shape[1]
        t = jnp.einsum("nihw,ioyx->nhywxo", x, wt)
        y = t.reshape(n, 2 * h, 2 * w, co) + bt.reshape(1, 1, 1, -1)
        return jnp.transpose(y, (0, 3, 1, 2))

    out = x_nchw
    for i, bp in enumerate(torch_params):
        skip = down_tensors_nchw[-(i + 1)]
        up = upconv(out, bp["wt"], bp["bt"])
        cat = jnp.concatenate([skip, up], axis=1)
        mid = conv3x3_relu(cat, bp["w1"], bp["b1"])
        out = conv3x3_relu(mid, bp["w2"], bp["b2"])
    return out


if __name__ == "__main__":
    key = jax.random.PRNGKey(0)
    k_x, k_s1, k_s2, k_p = jax.random.split(key, 4)

    depth, channel_multiplier, initial_channel_size = 1, 2, 4
    N = 2
    # Bottleneck input: channels = ics * cm**(depth+1) = 16, spatial 4x4.
    x = jax.random.normal(k_x, (N, 16, 4, 4), jnp.float32)
    # Encoder skip tensors in top-down order (decreasing resolution):
    #   skips[-1]=(N,8,8,8)  used by the first UpConvBlock,
    #   skips[-2]=(N,4,16,16) used by the second.
    skips = [jax.random.normal(k_s1, (N, 4, 16, 16), jnp.float32),
             jax.random.normal(k_s2, (N, 8, 8, 8), jnp.float32)]

    torch_params = init_upsample_params(k_p, depth, channel_multiplier,
                                        initial_channel_size)
    kernel_params = [prepare_block_for_kernels(bp) for bp in torch_params]

    out = jax.block_until_ready(upsample_forward(x, skips, kernel_params))
    ref = jax.block_until_ready(_reference(x, skips, torch_params))

    assert out.shape == ref.shape == (N, 4, 16, 16), out.shape
    err = float(jnp.max(jnp.abs(out - ref)))
    scale = float(jnp.max(jnp.abs(ref))) + 1.0
    assert err / scale < 3e-2, f"mismatch vs reference: max abs err {err}"
    print("KERNEL_OK")
</pallas_src>

<mosaic_0001>
module attributes {stable_mosaic.version = 11 : i64} {
  func.func @_upconv2x2_kernel(%arg0: i32, %arg1: memref<1x16x16xf32, #tpu.memory_space<vmem>>, %arg2: memref<16x128xbf16, #tpu.memory_space<vmem>>, %arg3: memref<1x128xf32, #tpu.memory_space<vmem>>, %arg4: memref<1x16x128xf32, #tpu.memory_space<vmem>>) attributes {dimension_semantics = [#tpu.dimension_semantics<parallel>], iteration_bounds = array<i64: 2>, scalar_prefetch = 0 : i64, scratch_operands = 0 : i64, tpu.core_type = #tpu.core_type<tc>, window_params = [{transform_indices = @transform_0, window_bounds = array<i64: 1, 16, 16>}, {pipeline_mode = #tpu.pipeline_mode<synchronous>, transform_indices = @transform_1, window_bounds = array<i64: 16, 128>}, {pipeline_mode = #tpu.pipeline_mode<synchronous>, transform_indices = @transform_2, window_bounds = array<i64: 1, 128>}, {transform_indices = @transform_3, window_bounds = array<i64: 1, 16, 128>}]} {
    %c0 = arith.constant 0 : index
    %c0_0 = arith.constant 0 : index
    %c0_1 = arith.constant 0 : index
    %0 = vector.load %arg1[%c0, %c0_0, %c0_1] : memref<1x16x16xf32, #tpu.memory_space<vmem>>, vector<1x16x16xf32>
    %1 = vector.shape_cast %0 : vector<1x16x16xf32> to vector<16x16xf32>
    %2 = arith.truncf %1 : vector<16x16xf32> to vector<16x16xbf16>
    %c0_2 = arith.constant 0 : index
    %c0_3 = arith.constant 0 : index
    %3 = vector.load %arg2[%c0_2, %c0_3] : memref<16x128xbf16, #tpu.memory_space<vmem>>, vector<16x128xbf16>
    %cst = arith.constant dense<0.000000e+00> : vector<16x128xf32>
    %4 = tpu.matmul %2, %3, %cst {dimension_numbers = #tpu.dot_dimension_numbers<[1], [0], [0], [1], [0, 0, 1, 1], [], []>} : vector<16x16xbf16>, vector<16x128xbf16>, vector<16x128xf32> -> vector<16x128xf32>
    %c0_4 = arith.constant 0 : index
    %c0_5 = arith.constant 0 : index
    %5 = vector.load %arg3[%c0_4, %c0_5] : memref<1x128xf32, #tpu.memory_space<vmem>>, vector<1x128xf32>
    %6 = vector.broadcast %5 : vector<1x128xf32> to vector<16x128xf32>
    %7 = arith.addf %4, %6 : vector<16x128xf32>
    %c0_6 = arith.constant 0 : index
    %c0_7 = arith.constant 0 : index
    %c0_8 = arith.constant 0 : index
    %8 = vector.load %arg4[%c0_6, %c0_7, %c0_8] : memref<1x16x128xf32, #tpu.memory_space<vmem>>, vector<1x16x128xf32>
    %9 = vector.shape_cast %8 : vector<1x16x128xf32> to vector<16x128xf32>
    %10 = vector.shape_cast %7 : vector<16x128xf32> to vector<1x16x128xf32>
    tpu.vector_store %arg4[%c0_6, %c0_7, %c0_8], %10 {strides = array<i32>} : memref<1x16x128xf32, #tpu.memory_space<vmem>>, vector<1x16x128xf32>,
    return
  }
  func.func @transform_0(%arg0: i32) -> (i32, i32, i32) {
    %c0_i32 = arith.constant 0 : i32
    %c0_i32_0 = arith.constant 0 : i32
    %c0_i32_1 = arith.constant 0 : i32
    return %arg0, %c0_i32, %c0_i32_0 : i32, i32, i32
  }
  func.func @transform_1(%arg0: i32) -> (i32, i32) {
    %c0_i32 = arith.constant 0 : i32
    %c0_i32_0 = arith.constant 0 : i32
    %c0_i32_1 = arith.constant 0 : i32
    return %c0_i32, %c0_i32_0 : i32, i32
  }
  func.func @transform_2(%arg0: i32) -> (i32, i32) {
    %c0_i32 = arith.constant 0 : i32
    %c0_i32_0 = arith.constant 0 : i32
    %c0_i32_1 = arith.constant 0 : i32
    return %c0_i32, %c0_i32_0 : i32, i32
  }
  func.func @transform_3(%arg0: i32) -> (i32, i32, i32) {
    %c0_i32 = arith.constant 0 : i32
    %c0_i32_0 = arith.constant 0 : i32
    %c0_i32_1 = arith.constant 0 : i32
    return %arg0, %c0_i32, %c0_i32_0 : i32, i32, i32
  }
}

</mosaic_0001>

<llo_original>
// kernel: tpu_custom_call.1
$region0: #{tpu_custom_call.1}
  #allocation0 [shape = 'u32[]', space=smem, size = 0x4, offset = 0x4, fixed_abs, tag = 'smem constant byte address 0x4 - core index']
  #allocation1 [shape = 'u32[144,128]{1,0:T(1,128)}', space=vmem, size = 0x12000, scoped, tag = 'internal scratch']
  %s0 = inlined_call_operand.hbm [shape: f32[2,16,16], index: 0, kind: input, shape index: {}]
  %s1 = inlined_call_operand.hbm [shape: bf16[16,128], index: 1, kind: input, shape index: {}]
  %s2 = inlined_call_operand.vmem [shape: f32[1,128], index: 2, kind: input, shape index: {}]
  %s3 = inlined_call_operand.hbm [shape: f32[2,16,128], index: 3, kind: output, shape index: {}]
  %s4 = sld [smem:[#allocation0]]
  $region53: #{tpu_custom_call.1} parent=0
    _
  %s6 = ssub.s32 1, %s4
  %s7 = scalar_select 0, %s6, %s4
  $region1: #{tpu_custom_call.1} parent=0
    #allocation2 [shape = 'u8[16384]{0}', space=vmem, size = 0x4000, scoped, tag = 'input window, operand 0']
    #allocation3 [shape = 's32[2]{0}', space=sflag, size = 0x8, scoped, tag = 'scoped memory for tpu_custom_call.1']
    #allocation4 [shape = 's32[2]{0}', space=sflag, size = 0x8, scoped, tag = 'scoped memory for tpu_custom_call.1']
    #allocation5 [shape = 'u8[4096]{0}', space=vmem, size = 0x1000, scoped, tag = 'input window, operand 1, single buffered']
    #allocation6 [shape = 's32[1]{0}', space=sflag, size = 0x4, scoped, tag = 'scoped memory for tpu_custom_call.1']
    #allocation7 [shape = 'u8[16384]{0}', space=vmem, size = 0x4000, scoped, tag = 'output window, operand 0']
    %8 = vsyncpa [#allocation3], 0
    %s9 = scalar_lea.sflag [#allocation3], 1
    %10 = vsyncpa %s9, 0
    %11 = vsyncpa [#allocation6], 0
    %12 = vsyncpa [#allocation4], 0
    %s13 = scalar_lea.sflag [#allocation4], 1
    %14 = vsyncpa %s13, 0
    loop: start=0, step=1, limit=4
    $region2: #{tpu_custom_call.1} parent=1 // loop_pre_header
      _
    $region3: #{tpu_custom_call.1} parent=1 // loop_header
      %s16 = sphi 0, %s20
      %p17 = scmp.ge.s32.totalorder %s16, 4
      %s26 = sphi 0, %s28
      %s29 = sphi 0, %s26
      %s30 = sphi 0, %s29
      %s46 = sphi 0, %s30
      %s50 = sphi 0, %s50
      %s52 = sphi 0, %s50
      %s53 = sphi 0, %s52
      %s67 = sphi 0, %s53
      %s71 = sphi 0, %s71
      %s73 = sphi 0, %s71
      %s74 = sphi 0, %s73
      %s88 = sphi 0, %s74
      %s94 = sphi 0, %s96
      %s97 = sphi 0, %s94
      %s98 = sphi 0, %s97
      %s114 = sphi 0, %s98
    $region4: #{tpu_custom_call.1} parent=1 // loop_header_branch
      %19 = sbr.rel (%p17) target = $region8
    $region5: #{tpu_custom_call.1} parent=1 // loop_body
      %s21 = ssub.s32 %s16, 1
      %s22 = ssub.s32 %s16, 2
      %s23 = sadd.s32 %s16, 1
      %s24 = ssub.s32 %s16, %s23
      %p25 = scmp.eq.s32.totalorder %s24, 0
      %s27 = sadd.s32 %s26, 1
      %s28 = scalar_select %p25, %s26, %s27
      %p31 = pneg %p25
      %p32 = scmp.eq.s32.totalorder %s16, 1
      %p33 = por %p31, %p32
      %p34 = scmp.ne.s32.totalorder %s26, %s29
      %p35 = scmp.eq.s32.totalorder %s16, 0
      %p36 = por %p34, %p35
      %p37 = scmp.ne.s32.totalorder %s26, %s29
      %p38 = scmp.eq.s32.totalorder %s21, 1
      %p39 = por %p37, %p38
      %p40 = scmp.ne.s32.totalorder %s29, %s30
      %p41 = scmp.eq.s32.totalorder %s21, 0
      %p42 = por %p40, %p41
      %p43 = scmp.ne.s32.totalorder %s29, %s30
      %p44 = scmp.eq.s32.totalorder %s22, 1
      %p45 = por %p43, %p44
      %p47 = scmp.ne.s32.totalorder %s30, %s46
      %p48 = scmp.eq.s32.totalorder %s22, 0
      %p49 = por %p47, %p48
      %s51 = sadd.s32 %s50, 1
      %p54 = scmp.eq.s32.totalorder %s16, 1
      %p55 = scmp.ne.s32.totalorder %s50, %s52
      %p56 = scmp.eq.s32.totalorder %s16, 0
      %p57 = por %p55, %p56
      %p58 = scmp.ne.s32.totalorder %s50, %s52
      %p59 = scmp.eq.s32.totalorder %s21, 1
      %p60 = por %p58, %p59
      %p61 = scmp.ne.s32.totalorder %s52, %s53
      %p62 = scmp.eq.s32.totalorder %s21, 0
      %p63 = por %p61, %p62
      %p64 = scmp.ne.s32.totalorder %s52, %s53
      %p65 = scmp.eq.s32.totalorder %s22, 1
      %p66 = por %p64, %p65
      %p68 = scmp.ne.s32.totalorder %s53, %s67
      %p69 = scmp.eq.s32.totalorder %s22, 0
      %p70 = por %p68, %p69
      %s72 = sadd.s32 %s71, 1
      %p75 = scmp.eq.s32.totalorder %s16, 1
      %p76 = scmp.ne.s32.totalorder %s71, %s73
      %p77 = scmp.eq.s32.totalorder %s16, 0
      %p78 = por %p76, %p77
      %p79 = scmp.ne.s32.totalorder %s71, %s73
      %p80 = scmp.eq.s32.totalorder %s21, 1
      %p81 = por %p79, %p80
      %p82 = scmp.ne.s32.totalorder %s73, %s74
      %p83 = scmp.eq.s32.totalorder %s21, 0
      %p84 = por %p82, %p83
      %p85 = scmp.ne.s32.totalorder %s73, %s74
      %p86 = scmp.eq.s32.totalorder %s22, 1
      %p87 = por %p85, %p86
      %p89 = scmp.ne.s32.totalorder %s74, %s88
      %p90 = scmp.eq.s32.totalorder %s22, 0
      %p91 = por %p89, %p90
      %s92 = ssub.s32 %s16, %s23
      %p93 = scmp.eq.s32.totalorder %s92, 0
      %s95 = sadd.s32 %s94, 1
      %s96 = scalar_select %p93, %s94, %s95
      %p99 = pneg %p93
      %p100 = scmp.eq.s32.totalorder %s16, 1
      %p101 = por %p99, %p100
      %p102 = scmp.ne.s32.totalorder %s94, %s97
      %p103 = scmp.eq.s32.totalorder %s16, 0
      %p104 = por %p102, %p103
      %p105 = scmp.ne.s32.totalorder %s94, %s97
      %p106 = scmp.eq.s32.totalorder %s21, 1
      %p107 = por %p105, %p106
      %p108 = scmp.ne.s32.totalorder %s97, %s98
      %p109 = scmp.eq.s32.totalorder %s21, 0
      %p110 = por %p108, %p109
      %p111 = scmp.ne.s32.totalorder %s97, %s98
      %p112 = scmp.eq.s32.totalorder %s22, 1
      %p113 = por %p111, %p112
      %p115 = scmp.ne.s32.totalorder %s98, %s114
      %p116 = scmp.eq.s32.totalorder %s22, 0
      %p117 = por %p115, %p116
      %p118 = scmp.le.s32.totalorder 1, %s16
      %p119 = scmp.lt.s32.totalorder %s16, 3
      %p120 = pnand %p118, %p119
      %p121 = pneg %p120
      // Predicated region
      $region9: #{tpu_custom_call.1} parent=5 // pred_check
        _
      $region10: #{tpu_custom_call.1} parent=5 // pred_check_branch
        %123 = sbr.rel (%p120) target = $region12
      $region11: #{tpu_custom_call.1} parent=5 // pred_region
        %s124 = ssub.s32 %s16, 1
        // Predicated region
        $region13: #{tpu_custom_call.1} parent=11 // pred_check
          %p125 = pneg %p63
        $region14: #{tpu_custom_call.1} parent=11 // pred_check_branch
          %127 = sbr.rel (%p125) target = $region16
        $region15: #{tpu_custom_call.1} parent=11 // pred_region
          %s129 = ssub.s32 128, 128
          %130 = vsyncadd [#allocation6], %s129
          %s131 = sshll.u32 [#allocation5], 4
          %s132 = int_to_ptr.vmem [resolvable:$true] %s131
          %137 = dma.hbm_to_vmem [thread:$0]  %s1, 128, %s132, [#allocation6], 64, 64, 4
        $region16: #{tpu_custom_call.1} parent=11 // pred_fallthru
          _
        // Predicated region
        $region17: #{tpu_custom_call.1} parent=11 // pred_check
          %p138 = pneg %p84
        $region18: #{tpu_custom_call.1} parent=11 // pred_check_branch
          %140 = sbr.rel (%p138) target = $region20
        $region19: #{tpu_custom_call.1} parent=11 // pred_region
          _
        $region20: #{tpu_custom_call.1} parent=11 // pred_fallthru
          _
      $region12: #{tpu_custom_call.1} parent=5 // pred_fallthru
        _
      %p141 = scmp.lt.s32.totalorder %s16, 2
      // Predicated region
      $region21: #{tpu_custom_call.1} parent=5 // pred_check
        %p142 = pneg %p141
      $region22: #{tpu_custom_call.1} parent=5 // pred_check_branch
        %144 = sbr.rel (%p142) target = $region24
      $region23: #{tpu_custom_call.1} parent=5 // pred_region
        // Predicated region
        $region25: #{tpu_custom_call.1} parent=23 // pred_check
          %p145 = pneg %p36
        $region26: #{tpu_custom_call.1} parent=23 // pred_check_branch
          %147 = sbr.rel (%p145) target = $region28
        $region27: #{tpu_custom_call.1} parent=23 // pred_region
          %s148 = sand.u32 %s26, 1
          %s149 = scalar_lea.sflag [#allocation3], %s148
          %s150 = sand.u32 %s26, 1
          %s151 = smul.addr %s150, 16
          %s152 = scalar_lea.vmem [#allocation2], %s151
          %s154 = ssub.s32 256, 256
          %155 = vsyncadd %s149, %s154
          %s156 = smul.addr %s16, 2
          %s157 = smul.addr %s156, 128
          %s158 = scalar_lea.hbm %s0, %s157
          %s159 = sshll.u32 %s152, 4
          %s160 = int_to_ptr.vmem [resolvable:$true] %s159
          %165 = dma.hbm_to_vmem [thread:$0]  %s158, 256, %s160, %s149, 128, 128, 8
        $region28: #{tpu_custom_call.1} parent=23 // pred_fallthru
          _
      $region24: #{tpu_custom_call.1} parent=5 // pred_fallthru
        _
      %p166 = scmp.le.s32.totalorder 1, %s16
      %p167 = scmp.lt.s32.totalorder %s16, 3
      %p168 = pnand %p166, %p167
      %p169 = pneg %p168
      // Predicated region
      $region29: #{tpu_custom_call.1} parent=5 // pred_check
        _
      $region30: #{tpu_custom_call.1} parent=5 // pred_check_branch
        %171 = sbr.rel (%p168) target = $region32
      $region31: #{tpu_custom_call.1} parent=5 // pred_region
        %s172 = ssub.s32 %s16, 1
        %s173 = sand.u32 %s29, 1
        %s174 = scalar_lea.sflag [#allocation3], %s173
        %s175 = sand.u32 %s29, 1
        %s176 = smul.addr %s175, 16
        %s177 = scalar_lea.vmem [#allocation2], %s176
        // Predicated region
        $region33: #{tpu_custom_call.1} parent=31 // pred_check
          %p178 = pneg %p42
        $region34: #{tpu_custom_call.1} parent=31 // pred_check_branch
          %180 = sbr.rel (%p178) target = $region36
        $region35: #{tpu_custom_call.1} parent=31 // pred_region
          %181 = dma.done %s174, 256
        $region36: #{tpu_custom_call.1} parent=31 // pred_fallthru
          _
        // Predicated region
        $region37: #{tpu_custom_call.1} parent=31 // pred_check
          %p182 = pneg %p63
        $region38: #{tpu_custom_call.1} parent=31 // pred_check_branch
          %184 = sbr.rel (%p182) target = $region40
        $region39: #{tpu_custom_call.1} parent=31 // pred_region
          %185 = dma.done [#allocation6], 128
        $region40: #{tpu_custom_call.1} parent=31 // pred_fallthru
          _
        %s186 = sand.u32 %s29, 1
        %s187 = scalar_lea.sflag [#allocation3], %s186
        %s188 = sand.u32 %s29, 1
        %s189 = smul.addr %s188, 16
        %s190 = scalar_lea.vmem [#allocation2], %s189
        %p191 = pneg %p42
        %p192 = pneg %p39
        %p193 = pneg %p63
        %p194 = pneg %p60
        %p195 = pneg %p84
        %p196 = pneg %p81
        %p197 = pneg %p110
        %p198 = pneg %p107
        %s199 = sand.u32 %s97, 1
        %s200 = scalar_lea.sflag [#allocation4], %s199
        %s201 = sand.u32 %s97, 1
        %s202 = smul.addr %s201, 16
        %s203 = scalar_lea.vmem [#allocation7], %s202
        %v205 = vld [vmem:[%s177] sm:$0xff]
        %v206 = vld [vmem:[%s177 + $0x8] sm:$0xff]
        %v207 = vpack.c.bf16 %v206, %v205
        %v208 = vld [vmem:[#allocation5] sm:$0xf]
        %v209 = vld [vmem:[#allocation5 + $0x4] sm:$0xf]
        %v210 = vld [vmem:[%s2] sm:$0x1]
        %v212 = vlaneseq
        %v213 = vshrl.u32 %v212, 7
        %v214 = vsub.s32 0, %v213
        %v215 = vrot.slane %v210, %v214
        %v219 = vunpack.c.l.b16 %v208
        %v220 = vunpack.c.l.b16 %v209
        %v221 = vpack.c.b16 %v220, %v219
        %vm223 = vcmask 130048
        %v225 = vsel %vm223, %v207, 0
        %227 = vmatprep.subr.bf16.mxu0 0
        %228 = vmatpush1.bf16.msra.mxu0 %v221
        %229 = vmatprep.subr.bf16.mxu0 0
        %230 = vmatpush1.bf16.msra.mxu0 0
        %231 = vmatprep.subr.bf16.mxu0 0
        %232 = vmatpush1.bf16.msra.mxu0 0
        %233 = vmatprep.subr.bf16.mxu0 0
        %234 = vmatpush1.bf16.msra.mxu0 0
        %235 = vmatprep.subr.bf16.mxu0 0
        %236 = vmatpush1.bf16.msra.mxu0 0
        %237 = vmatprep.subr.bf16.mxu0 0
        %238 = vmatpush1.bf16.msra.mxu0 0
        %239 = vmatprep.subr.bf16.mxu0 0
        %240 = vmatpush1.bf16.msra.mxu0 0
        %241 = vmatprep.subr.bf16.mxu0 0
        %242 = vmatpush1.bf16.msra.mxu0 0
        %243 = vmatprep.subr.bf16.mxu0 0
        %244 = vmatpush1.bf16.msra.mxu0 0
        %245 = vmatprep.subr.bf16.mxu0 0
        %246 = vmatpush1.bf16.msra.mxu0 0
        %247 = vmatprep.subr.bf16.mxu0 0
        %248 = vmatpush1.bf16.msra.mxu0 0
        %249 = vmatprep.subr.bf16.mxu0 0
        %250 = vmatpush1.bf16.msra.mxu0 0
        %251 = vmatprep.subr.bf16.mxu0 0
        %252 = vmatpush1.bf16.msra.mxu0 0
        %253 = vmatprep.subr.bf16.mxu0 0
        %254 = vmatpush1.bf16.msra.mxu0 0
        %255 = vmatprep.subr.bf16.mxu0 0
        %256 = vmatpush1.bf16.msra.mxu0 0
        %257 = vmatprep.subr.bf16.mxu0 0
        %258 = vmatpush1.bf16.msra.mxu0 0
        %259 = vmatprep.mubr.bf16.mxu0 0
        %260 = vmatmul.mubr.bf16.gmra.mrb[0].mxu0 %v225
        %v261 = vpop.f32.mrb[0].mxu0
        %v262 = vadd.f32 %v215, %v261
        %v263 = vpop.f32.mrb[0].mxu0
        %v264 = vpop.f32.mrb[0].mxu0
        %v265 = vadd.f32 %v215, %v264
        %v266 = vpop.f32.mrb[0].mxu0
        %267 = vdwg.mxu0
        %268 = vst [vmem:[%s203] sm:$0xff] %v262
        %269 = vst [vmem:[%s203 + $0x8] sm:$0xff] %v265
        %s270 = sand.u32 %s97, 1
        %s271 = scalar_lea.sflag [#allocation4], %s270
        %s272 = sand.u32 %s97, 1
        %s273 = smul.addr %s272, 16
        %s274 = scalar_lea.vmem [#allocation7], %s273
        // Predicated region
        $region41: #{tpu_custom_call.1} parent=31 // pred_check
          %p275 = pneg %p107
        $region42: #{tpu_custom_call.1} parent=31 // pred_check_branch
          %277 = sbr.rel (%p275) target = $region44
        $region43: #{tpu_custom_call.1} parent=31 // pred_region
          %s279 = ssub.s32 256, 256
          %280 = vsyncadd %s271, %s279
          %s281 = smul.addr %s21, 2
          %s282 = smul.addr %s281, 128
          %s283 = scalar_lea.hbm %s3, %s282
          %s284 = sshll.u32 %s274, 4
          %s285 = int_to_ptr.vmem [resolvable:$true] %s284
          %290 = dma.vmem_to_hbm [thread:$0]  %s285, 256, %s283, %s271, 128, 128, 8
        $region44: #{tpu_custom_call.1} parent=31 // pred_fallthru
          _
      $region32: #{tpu_custom_call.1} parent=5 // pred_fallthru
        _
      %p291 = scmp.le.s32.totalorder 2, %s16
      // Predicated region
      $region45: #{tpu_custom_call.1} parent=5 // pred_check
        %p292 = pneg %p291
      $region46: #{tpu_custom_call.1} parent=5 // pred_check_branch
        %294 = sbr.rel (%p292) target = $region48
      $region47: #{tpu_custom_call.1} parent=5 // pred_region
        %s295 = ssub.s32 %s16, 2
        // Predicated region
        $region49: #{tpu_custom_call.1} parent=47 // pred_check
          %p296 = pneg %p113
        $region50: #{tpu_custom_call.1} parent=47 // pred_check_branch
          %298 = sbr.rel (%p296) target = $region52
        $region51: #{tpu_custom_call.1} parent=47 // pred_region
          %s299 = sand.u32 %s98, 1
          %s300 = scalar_lea.sflag [#allocation4], %s299
          %s301 = sand.u32 %s98, 1
          %s302 = smul.addr %s301, 16
          %s303 = scalar_lea.vmem [#allocation7], %s302
          %304 = dma.done %s300, 256
        $region52: #{tpu_custom_call.1} parent=47 // pred_fallthru
          _
      $region48: #{tpu_custom_call.1} parent=5 // pred_fallthru
        _
    $region6: #{tpu_custom_call.1} parent=1 // loop_footer
      %s20 = sadd.s32 1, %s16
    $region7: #{tpu_custom_call.1} parent=1 // loop_footer_branch
      %15 = sbr.rel target = $region3
    $region8: #{tpu_custom_call.1} parent=1 // loop_exit
      _
    %305 = vsyncpa [#allocation3], 1
    %s306 = scalar_lea.sflag [#allocation3], 1
    %307 = vsyncpa %s306, 1
    %308 = vsyncpa [#allocation6], 1
    %309 = vsyncpa [#allocation4], 1
    %s310 = scalar_lea.sflag [#allocation4], 1
    %311 = vsyncpa %s310, 1

</llo_original>
